<compile_context>
chip_gen: v5e
topology: v5e:2x2
jax: 0.10.0
libtpu: 0.0.40
codegen_flags: <defaults>
</compile_context>

<pallas_src>
import jax
import jax.numpy as jnp
from jax.experimental import pallas as pl
from jax.experimental.pallas import tpu as pltpu


# ----------------------------------------------------------------------------- kernel

def fc_classifier_kernel(x_ref,
                         w1_ref, b1_ref,
                         w2_ref, b2_ref,
                         w3_ref, b3_ref,
                         w4_ref, b4_ref,
                         o_ref):
    def dense(h, w_ref, b_ref, relu):
        # Cast activations to the weight dtype (bf16 MXU path by default; no-op
        # for f32 weights).  Accumulate in f32; bias + ReLU stay in f32.
        y = jnp.dot(h.astype(w_ref.dtype), w_ref[...],
                    preferred_element_type=jnp.float32)
        y = y + b_ref[...]
        return jnp.maximum(y, 0.0) if relu else y

    h = x_ref[...].astype(jnp.float32)
    h = dense(h, w1_ref, b1_ref, relu=True)
    h = dense(h, w2_ref, b2_ref, relu=True)
    h = dense(h, w3_ref, b3_ref, relu=True)
    y = dense(h, w4_ref, b4_ref, relu=False)

    o_ref[...] = y.astype(o_ref.dtype)


# ----------------------------------------------------------------------------- helpers

def _round_up(x, m):
    return ((x + m - 1) // m) * m


def _physical_vmem_bytes():
    try:
        return int(pltpu.get_tpu_info().vmem_capacity_bytes)
    except Exception:
        return 64 << 20  # conservative fallback: v7x per-TensorCore VMEM


def _const_spec(shape):
    """Whole-array, constant-index block that stays VMEM-resident; single-buffered."""
    idx = lambda i: tuple(0 for _ in shape)
    try:
        return pl.BlockSpec(shape, idx, pipeline_mode=pl.Buffered(1))
    except TypeError:   # older BlockSpec signature without pipeline_mode
        return pl.BlockSpec(shape, idx)


def prepare_params(params, *, weight_dtype=jnp.bfloat16):
    """Hoisted weight prep: PyTorch nn.Linear layout ([out, in] weights, [out]
    biases) -> transposed [in, out] weights cast to `weight_dtype` with the
    output dims zero-padded to a multiple of 128; biases stay f32.  Call once
    and reuse the returned dict for every forward pass."""
    LANE = 128
    nz = params["w1"].shape[1]
    n_hidden = params["w1"].shape[0]
    n_out = params["w4"].shape[0]
    nh_p = _round_up(n_hidden, LANE)
    no_p = _round_up(n_out, LANE)          # lane-dense output

    def prep_w(w, in_p, out_p):
        wt = jnp.asarray(w).T.astype(weight_dtype)      # [in, out]
        return jnp.pad(wt, ((0, in_p - wt.shape[0]), (0, out_p - wt.shape[1])))

    def prep_b(b, out_p):
        bv = jnp.asarray(b).astype(jnp.float32).reshape(1, -1)   # bias kept f32
        return jnp.pad(bv, ((0, 0), (0, out_p - bv.shape[1])))

    return dict(
        nz=nz, n_hidden=n_hidden, n_out=n_out, nh_p=nh_p, no_p=no_p,
        weight_dtype=jnp.dtype(weight_dtype),
        w1=prep_w(params["w1"], nz, nh_p),   b1=prep_b(params["b1"], nh_p),
        w2=prep_w(params["w2"], nh_p, nh_p), b2=prep_b(params["b2"], nh_p),
        w3=prep_w(params["w3"], nh_p, nh_p), b3=prep_b(params["b3"], nh_p),
        w4=prep_w(params["w4"], nh_p, no_p), b4=prep_b(params["b4"], no_p),
    )


# ----------------------------------------------------------------------------- wrapper

def fc_classifier_forward(x, prep, *, block_b=512):
    """x: [B, nz] float32.  prep: output of prepare_params().  Returns [B, n_out]."""
    B, nz = x.shape
    assert nz == prep["nz"], "input feature dim mismatch"
    SUB = 8
    nh_p, no_p, n_out = prep["nh_p"], prep["no_p"], prep["n_out"]

    # Batch tile: large tiles amortize the ~0.35 us per-grid-step overhead, but
    # keep >= 2 grid steps when the batch allows it so the "parallel" axis can
    # be sharded across both v7x TensorCores.
    bb = min(block_b, _round_up(B, SUB))
    bb = _round_up(bb, SUB)
    if pl.cdiv(B, bb) < 2 and B > SUB:
        bb = _round_up(pl.cdiv(B, 2), SUB)
    grid = (pl.cdiv(B, bb),)

    # VMEM estimate: weights single-buffered, x/out double-buffered, f32 activations.
    wdt = prep["weight_dtype"]
    weight_bytes = ((nz * nh_p + 2 * nh_p * nh_p + nh_p * no_p) * wdt.itemsize
                    + (3 * nh_p + no_p) * 4)
    io_bytes = 2 * (bb * nz + bb * no_p) * x.dtype.itemsize
    act_bytes = 4 * bb * nh_p * 4
    est = weight_bytes + io_bytes + act_bytes
    phys = _physical_vmem_bytes()
    vmem_limit = int(min(est * 1.25, 0.9 * phys)) if est > (16 << 20) else None

    out = pl.pallas_call(
        fc_classifier_kernel,
        out_shape=jax.ShapeDtypeStruct((B, no_p), x.dtype),
        grid_spec=pltpu.PrefetchScalarGridSpec(
            num_scalar_prefetch=0,
            grid=grid,
            in_specs=[
                pl.BlockSpec((bb, nz), lambda i: (i, 0)),          # x tile (unpadded nz)
                _const_spec(prep["w1"].shape), _const_spec(prep["b1"].shape),  # layer 1
                _const_spec(prep["w2"].shape), _const_spec(prep["b2"].shape),  # layer 2
                _const_spec(prep["w3"].shape), _const_spec(prep["b3"].shape),  # layer 3
                _const_spec(prep["w4"].shape), _const_spec(prep["b4"].shape),  # layer 4
            ],
            out_specs=pl.BlockSpec((bb, no_p), lambda i: (i, 0)),
        ),
        compiler_params=pltpu.CompilerParams(
            dimension_semantics=("parallel",),
            vmem_limit_bytes=vmem_limit),
    )(x, prep["w1"], prep["b1"], prep["w2"], prep["b2"],
      prep["w3"], prep["b3"], prep["w4"], prep["b4"])

    return out[:, :n_out]


# ----------------------------------------------------------------------------- reference / init

def init_params(key, nz, n_hidden, n_out):
    """Deterministic init matching PyTorch nn.Linear shapes ([out, in] / [out])."""
    ks = jax.random.split(key, 8)

    def lin(kw, kb, fan_in, fan_out):
        bound = 1.0 / jnp.sqrt(fan_in)
        w = jax.random.uniform(kw, (fan_out, fan_in), jnp.float32, -bound, bound)
        b = jax.random.uniform(kb, (fan_out,), jnp.float32, -bound, bound)
        return w, b

    w1, b1 = lin(ks[0], ks[1], nz, n_hidden)
    w2, b2 = lin(ks[2], ks[3], n_hidden, n_hidden)
    w3, b3 = lin(ks[4], ks[5], n_hidden, n_hidden)
    w4, b4 = lin(ks[6], ks[7], n_hidden, n_out)
    return dict(w1=w1, b1=b1, w2=w2, b2=b2, w3=w3, b3=b3, w4=w4, b4=b4)


def reference_forward(x, p):
    h = jnp.maximum(x @ p["w1"].T + p["b1"], 0.0)
    h = jnp.maximum(h @ p["w2"].T + p["b2"], 0.0)
    h = jnp.maximum(h @ p["w3"].T + p["b3"], 0.0)
    return h @ p["w4"].T + p["b4"]


# ----------------------------------------------------------------------------- demo

if __name__ == "__main__":
    key = jax.random.PRNGKey(0)
    k_x, k_p = jax.random.split(key)

    # Small shapes consistent with FC_Classifier(nz=32, n_hidden=128, n_out=2).
    B, nz, n_hidden, n_out = 16, 32, 128, 2

    x = jax.random.normal(k_x, (B, nz), jnp.float32)
    params = init_params(k_p, nz, n_hidden, n_out)
    y_ref = reference_forward(x, params)

    # Default bf16 MXU path (prep hoisted / done once, reused across calls).
    prep_bf16 = prepare_params(params)                       # weight_dtype=bf16
    y = jax.block_until_ready(fc_classifier_forward(x, prep_bf16))
    assert y.shape == (B, n_out)
    assert jnp.allclose(y, y_ref, atol=5e-2, rtol=5e-2), "bf16 path mismatch"

    # f32-weight path: exact-semantics check at tight tolerance.
    prep_f32 = prepare_params(params, weight_dtype=jnp.float32)
    y32 = jax.block_until_ready(fc_classifier_forward(x, prep_f32))
    assert jnp.allclose(y32, y_ref, atol=1e-4, rtol=1e-4), "f32 path mismatch"

    # Ragged, larger batch: multi-step grid, unpadded tail tile.
    B2 = 300
    x2 = jax.random.normal(k_x, (B2, nz), jnp.float32)
    y2 = jax.block_until_ready(fc_classifier_forward(x2, prep_f32, block_b=512))
    assert y2.shape == (B2, n_out)
    assert jnp.allclose(y2, reference_forward(x2, params), atol=1e-4, rtol=1e-4)

    print("KERNEL_OK")
</pallas_src>

<mosaic_0001>
module attributes {stable_mosaic.version = 11 : i64} {
  func.func @fc_classifier_kernel(%arg0: i32, %arg1: memref<8x32xf32, #tpu.memory_space<vmem>>, %arg2: memref<32x128xbf16, #tpu.memory_space<vmem>>, %arg3: memref<1x128xf32, #tpu.memory_space<vmem>>, %arg4: memref<128x128xbf16, #tpu.memory_space<vmem>>, %arg5: memref<1x128xf32, #tpu.memory_space<vmem>>, %arg6: memref<128x128xbf16, #tpu.memory_space<vmem>>, %arg7: memref<1x128xf32, #tpu.memory_space<vmem>>, %arg8: memref<128x128xbf16, #tpu.memory_space<vmem>>, %arg9: memref<1x128xf32, #tpu.memory_space<vmem>>, %arg10: memref<8x128xf32, #tpu.memory_space<vmem>>) attributes {dimension_semantics = [#tpu.dimension_semantics<parallel>], iteration_bounds = array<i64: 2>, scalar_prefetch = 0 : i64, scratch_operands = 0 : i64, tpu.core_type = #tpu.core_type<tc>, window_params = [{transform_indices = @transform_0, window_bounds = array<i64: 8, 32>}, {pipeline_mode = #tpu.pipeline_mode<synchronous>, transform_indices = @transform_1, window_bounds = array<i64: 32, 128>}, {pipeline_mode = #tpu.pipeline_mode<synchronous>, transform_indices = @transform_2, window_bounds = array<i64: 1, 128>}, {pipeline_mode = #tpu.pipeline_mode<synchronous>, transform_indices = @transform_3, window_bounds = array<i64: 128, 128>}, {pipeline_mode = #tpu.pipeline_mode<synchronous>, transform_indices = @transform_4, window_bounds = array<i64: 1, 128>}, {pipeline_mode = #tpu.pipeline_mode<synchronous>, transform_indices = @transform_5, window_bounds = array<i64: 128, 128>}, {pipeline_mode = #tpu.pipeline_mode<synchronous>, transform_indices = @transform_6, window_bounds = array<i64: 1, 128>}, {pipeline_mode = #tpu.pipeline_mode<synchronous>, transform_indices = @transform_7, window_bounds = array<i64: 128, 128>}, {pipeline_mode = #tpu.pipeline_mode<synchronous>, transform_indices = @transform_8, window_bounds = array<i64: 1, 128>}, {transform_indices = @transform_9, window_bounds = array<i64: 8, 128>}]} {
    %c0 = arith.constant 0 : index
    %c0_0 = arith.constant 0 : index
    %0 = vector.load %arg1[%c0, %c0_0] : memref<8x32xf32, #tpu.memory_space<vmem>>, vector<8x32xf32>
    %1 = arith.truncf %0 : vector<8x32xf32> to vector<8x32xbf16>
    %c0_1 = arith.constant 0 : index
    %c0_2 = arith.constant 0 : index
    %2 = vector.load %arg2[%c0_1, %c0_2] : memref<32x128xbf16, #tpu.memory_space<vmem>>, vector<32x128xbf16>
    %cst = arith.constant dense<0.000000e+00> : vector<8x128xf32>
    %3 = tpu.matmul %1, %2, %cst {dimension_numbers = #tpu.dot_dimension_numbers<[1], [0], [0], [1], [0, 0, 1, 1], [], []>} : vector<8x32xbf16>, vector<32x128xbf16>, vector<8x128xf32> -> vector<8x128xf32>
    %c0_3 = arith.constant 0 : index
    %c0_4 = arith.constant 0 : index
    %4 = vector.load %arg3[%c0_3, %c0_4] : memref<1x128xf32, #tpu.memory_space<vmem>>, vector<1x128xf32>
    %5 = vector.broadcast %4 : vector<1x128xf32> to vector<8x128xf32>
    %6 = arith.addf %3, %5 : vector<8x128xf32>
    %cst_5 = arith.constant 0.000000e+00 : f32
    %7 = vector.broadcast %cst_5 : f32 to vector<8x128xf32>
    %8 = arith.maximumf %6, %7 : vector<8x128xf32>
    %9 = arith.truncf %8 : vector<8x128xf32> to vector<8x128xbf16>
    %c0_6 = arith.constant 0 : index
    %c0_7 = arith.constant 0 : index
    %10 = vector.load %arg4[%c0_6, %c0_7] : memref<128x128xbf16, #tpu.memory_space<vmem>>, vector<128x128xbf16>
    %cst_8 = arith.constant dense<0.000000e+00> : vector<8x128xf32>
    %11 = tpu.matmul %9, %10, %cst_8 {dimension_numbers = #tpu.dot_dimension_numbers<[1], [0], [0], [1], [0, 0, 1, 1], [], []>} : vector<8x128xbf16>, vector<128x128xbf16>, vector<8x128xf32> -> vector<8x128xf32>
    %c0_9 = arith.constant 0 : index
    %c0_10 = arith.constant 0 : index
    %12 = vector.load %arg5[%c0_9, %c0_10] : memref<1x128xf32, #tpu.memory_space<vmem>>, vector<1x128xf32>
    %13 = vector.broadcast %12 : vector<1x128xf32> to vector<8x128xf32>
    %14 = arith.addf %11, %13 : vector<8x128xf32>
    %cst_11 = arith.constant 0.000000e+00 : f32
    %15 = vector.broadcast %cst_11 : f32 to vector<8x128xf32>
    %16 = arith.maximumf %14, %15 : vector<8x128xf32>
    %17 = arith.truncf %16 : vector<8x128xf32> to vector<8x128xbf16>
    %c0_12 = arith.constant 0 : index
    %c0_13 = arith.constant 0 : index
    %18 = vector.load %arg6[%c0_12, %c0_13] : memref<128x128xbf16, #tpu.memory_space<vmem>>, vector<128x128xbf16>
    %cst_14 = arith.constant dense<0.000000e+00> : vector<8x128xf32>
    %19 = tpu.matmul %17, %18, %cst_14 {dimension_numbers = #tpu.dot_dimension_numbers<[1], [0], [0], [1], [0, 0, 1, 1], [], []>} : vector<8x128xbf16>, vector<128x128xbf16>, vector<8x128xf32> -> vector<8x128xf32>
    %c0_15 = arith.constant 0 : index
    %c0_16 = arith.constant 0 : index
    %20 = vector.load %arg7[%c0_15, %c0_16] : memref<1x128xf32, #tpu.memory_space<vmem>>, vector<1x128xf32>
    %21 = vector.broadcast %20 : vector<1x128xf32> to vector<8x128xf32>
    %22 = arith.addf %19, %21 : vector<8x128xf32>
    %cst_17 = arith.constant 0.000000e+00 : f32
    %23 = vector.broadcast %cst_17 : f32 to vector<8x128xf32>
    %24 = arith.maximumf %22, %23 : vector<8x128xf32>
    %25 = arith.truncf %24 : vector<8x128xf32> to vector<8x128xbf16>
    %c0_18 = arith.constant 0 : index
    %c0_19 = arith.constant 0 : index
    %26 = vector.load %arg8[%c0_18, %c0_19] : memref<128x128xbf16, #tpu.memory_space<vmem>>, vector<128x128xbf16>
    %cst_20 = arith.constant dense<0.000000e+00> : vector<8x128xf32>
    %27 = tpu.matmul %25, %26, %cst_20 {dimension_numbers = #tpu.dot_dimension_numbers<[1], [0], [0], [1], [0, 0, 1, 1], [], []>} : vector<8x128xbf16>, vector<128x128xbf16>, vector<8x128xf32> -> vector<8x128xf32>
    %c0_21 = arith.constant 0 : index
    %c0_22 = arith.constant 0 : index
    %28 = vector.load %arg9[%c0_21, %c0_22] : memref<1x128xf32, #tpu.memory_space<vmem>>, vector<1x128xf32>
    %29 = vector.broadcast %28 : vector<1x128xf32> to vector<8x128xf32>
    %30 = arith.addf %27, %29 : vector<8x128xf32>
    %c0_23 = arith.constant 0 : index
    %c0_24 = arith.constant 0 : index
    %31 = vector.load %arg10[%c0_23, %c0_24] : memref<8x128xf32, #tpu.memory_space<vmem>>, vector<8x128xf32>
    tpu.vector_store %arg10[%c0_23, %c0_24], %30 {strides = array<i32>} : memref<8x128xf32, #tpu.memory_space<vmem>>, vector<8x128xf32>,
    return
  }
  func.func @transform_0(%arg0: i32) -> (i32, i32) {
    %c0_i32 = arith.constant 0 : i32
    %c0_i32_0 = arith.constant 0 : i32
    return %arg0, %c0_i32 : i32, i32
  }
  func.func @transform_1(%arg0: i32) -> (i32, i32) {
    %c0_i32 = arith.constant 0 : i32
    %c0_i32_0 = arith.constant 0 : i32
    %c0_i32_1 = arith.constant 0 : i32
    return %c0_i32, %c0_i32_0 : i32, i32
  }
  func.func @transform_2(%arg0: i32) -> (i32, i32) {
    %c0_i32 = arith.constant 0 : i32
    %c0_i32_0 = arith.constant 0 : i32
    %c0_i32_1 = arith.constant 0 : i32
    return %c0_i32, %c0_i32_0 : i32, i32
  }
  func.func @transform_3(%arg0: i32) -> (i32, i32) {
    %c0_i32 = arith.constant 0 : i32
    %c0_i32_0 = arith.constant 0 : i32
    %c0_i32_1 = arith.constant 0 : i32
    return %c0_i32, %c0_i32_0 : i32, i32
  }
  func.func @transform_4(%arg0: i32) -> (i32, i32) {
    %c0_i32 = arith.constant 0 : i32
    %c0_i32_0 = arith.constant 0 : i32
    %c0_i32_1 = arith.constant 0 : i32
    return %c0_i32, %c0_i32_0 : i32, i32
  }
  func.func @transform_5(%arg0: i32) -> (i32, i32) {
    %c0_i32 = arith.constant 0 : i32
    %c0_i32_0 = arith.constant 0 : i32
    %c0_i32_1 = arith.constant 0 : i32
    return %c0_i32, %c0_i32_0 : i32, i32
  }
  func.func @transform_6(%arg0: i32) -> (i32, i32) {
    %c0_i32 = arith.constant 0 : i32
    %c0_i32_0 = arith.constant 0 : i32
    %c0_i32_1 = arith.constant 0 : i32
    return %c0_i32, %c0_i32_0 : i32, i32
  }
  func.func @transform_7(%arg0: i32) -> (i32, i32) {
    %c0_i32 = arith.constant 0 : i32
    %c0_i32_0 = arith.constant 0 : i32
    %c0_i32_1 = arith.constant 0 : i32
    return %c0_i32, %c0_i32_0 : i32, i32
  }
  func.func @transform_8(%arg0: i32) -> (i32, i32) {
    %c0_i32 = arith.constant 0 : i32
    %c0_i32_0 = arith.constant 0 : i32
    %c0_i32_1 = arith.constant 0 : i32
    return %c0_i32, %c0_i32_0 : i32, i32
  }
  func.func @transform_9(%arg0: i32) -> (i32, i32) {
    %c0_i32 = arith.constant 0 : i32
    %c0_i32_0 = arith.constant 0 : i32
    return %arg0, %c0_i32 : i32, i32
  }
}

</mosaic_0001>

<llo_original>
// kernel: tpu_custom_call.1
$region0: #{tpu_custom_call.1}
  #allocation0 [shape = 'u32[]', space=smem, size = 0x4, offset = 0x4, fixed_abs, tag = 'smem constant byte address 0x4 - core index']
  #allocation1 [shape = 'u32[72,128]{1,0:T(1,128)}', space=vmem, size = 0x9000, scoped, tag = 'internal scratch']
  %s0 = inlined_call_operand.hbm [shape: f32[16,32], index: 0, kind: input, shape index: {}]
  %s1 = inlined_call_operand.hbm [shape: bf16[32,128], index: 1, kind: input, shape index: {}]
  %s2 = inlined_call_operand.vmem [shape: f32[1,128], index: 2, kind: input, shape index: {}]
  %s3 = inlined_call_operand.hbm [shape: bf16[128,128], index: 3, kind: input, shape index: {}]
  %s4 = inlined_call_operand.vmem [shape: f32[1,128], index: 4, kind: input, shape index: {}]
  %s5 = inlined_call_operand.hbm [shape: bf16[128,128], index: 5, kind: input, shape index: {}]
  %s6 = inlined_call_operand.vmem [shape: f32[1,128], index: 6, kind: input, shape index: {}]
  %s7 = inlined_call_operand.hbm [shape: bf16[128,128], index: 7, kind: input, shape index: {}]
  %s8 = inlined_call_operand.vmem [shape: f32[1,128], index: 8, kind: input, shape index: {}]
  %s9 = inlined_call_operand.hbm [shape: f32[16,128], index: 9, kind: output, shape index: {}]
  %s10 = sld [smem:[#allocation0]]
  $region89: #{tpu_custom_call.1} parent=0
    _
  %s12 = ssub.s32 1, %s10
  %s13 = scalar_select 0, %s12, %s10
  $region1: #{tpu_custom_call.1} parent=0
    #allocation2 [shape = 'u8[8192]{0}', space=vmem, size = 0x2000, scoped, tag = 'input window, operand 0']
    #allocation3 [shape = 's32[2]{0}', space=sflag, size = 0x8, scoped, tag = 'scoped memory for tpu_custom_call.1']
    #allocation4 [shape = 's32[2]{0}', space=sflag, size = 0x8, scoped, tag = 'scoped memory for tpu_custom_call.1']
    #allocation5 [shape = 'u8[8192]{0}', space=vmem, size = 0x2000, scoped, tag = 'input window, operand 1, single buffered']
    #allocation6 [shape = 's32[1]{0}', space=sflag, size = 0x4, scoped, tag = 'scoped memory for tpu_custom_call.1']
    #allocation7 [shape = 'u8[32768]{0}', space=vmem, size = 0x8000, scoped, tag = 'input window, operand 3, single buffered']
    #allocation8 [shape = 'u8[32768]{0}', space=vmem, size = 0x8000, scoped, tag = 'input window, operand 5, single buffered']
    #allocation9 [shape = 's32[1]{0}', space=sflag, size = 0x4, scoped, tag = 'scoped memory for tpu_custom_call.1']
    #allocation10 [shape = 'u8[32768]{0}', space=vmem, size = 0x8000, scoped, tag = 'input window, operand 7, single buffered']
    #allocation11 [shape = 'u8[8192]{0}', space=vmem, size = 0x2000, scoped, tag = 'output window, operand 0']
    %14 = vsyncpa [#allocation3], 0
    %s15 = scalar_lea.sflag [#allocation3], 1
    %16 = vsyncpa %s15, 0
    %17 = vsyncpa [#allocation6], 0
    %18 = vsyncpa [#allocation9], 0
    %19 = vsyncpa [#allocation4], 0
    %s20 = scalar_lea.sflag [#allocation4], 1
    %21 = vsyncpa %s20, 0
    loop: start=0, step=1, limit=4
    $region2: #{tpu_custom_call.1} parent=1 // loop_pre_header
      _
    $region3: #{tpu_custom_call.1} parent=1 // loop_header
      %s23 = sphi 0, %s27
      %p24 = scmp.ge.s32.totalorder %s23, 4
      %s33 = sphi 0, %s35
      %s36 = sphi 0, %s33
      %s37 = sphi 0, %s36
      %s53 = sphi 0, %s37
      %s57 = sphi 0, %s57
      %s59 = sphi 0, %s57
      %s60 = sphi 0, %s59
      %s74 = sphi 0, %s60
      %s78 = sphi 0, %s78
      %s80 = sphi 0, %s78
      %s81 = sphi 0, %s80
      %s95 = sphi 0, %s81
      %s99 = sphi 0, %s99
      %s101 = sphi 0, %s99
      %s102 = sphi 0, %s101
      %s116 = sphi 0, %s102
      %s120 = sphi 0, %s120
      %s122 = sphi 0, %s120
      %s123 = sphi 0, %s122
      %s137 = sphi 0, %s123
      %s141 = sphi 0, %s141
      %s143 = sphi 0, %s141
      %s144 = sphi 0, %s143
      %s158 = sphi 0, %s144
      %s162 = sphi 0, %s162
      %s164 = sphi 0, %s162
      %s165 = sphi 0, %s164
      %s179 = sphi 0, %s165
      %s183 = sphi 0, %s183
      %s185 = sphi 0, %s183
      %s186 = sphi 0, %s185
      %s200 = sphi 0, %s186
      %s204 = sphi 0, %s204
      %s206 = sphi 0, %s204
      %s207 = sphi 0, %s206
      %s221 = sphi 0, %s207
      %s227 = sphi 0, %s229
      %s230 = sphi 0, %s227
      %s231 = sphi 0, %s230
      %s247 = sphi 0, %s231
    $region4: #{tpu_custom_call.1} parent=1 // loop_header_branch
      %26 = sbr.rel (%p24) target = $region8
    $region5: #{tpu_custom_call.1} parent=1 // loop_body
      %s28 = ssub.s32 %s23, 1
      %s29 = ssub.s32 %s23, 2
      %s30 = sadd.s32 %s23, 1
      %s31 = ssub.s32 %s23, %s30
      %p32 = scmp.eq.s32.totalorder %s31, 0
      %s34 = sadd.s32 %s33, 1
      %s35 = scalar_select %p32, %s33, %s34
      %p38 = pneg %p32
      %p39 = scmp.eq.s32.totalorder %s23, 1
      %p40 = por %p38, %p39
      %p41 = scmp.ne.s32.totalorder %s33, %s36
      %p42 = scmp.eq.s32.totalorder %s23, 0
      %p43 = por %p41, %p42
      %p44 = scmp.ne.s32.totalorder %s33, %s36
      %p45 = scmp.eq.s32.totalorder %s28, 1
      %p46 = por %p44, %p45
      %p47 = scmp.ne.s32.totalorder %s36, %s37
      %p48 = scmp.eq.s32.totalorder %s28, 0
      %p49 = por %p47, %p48
      %p50 = scmp.ne.s32.totalorder %s36, %s37
      %p51 = scmp.eq.s32.totalorder %s29, 1
      %p52 = por %p50, %p51
      %p54 = scmp.ne.s32.totalorder %s37, %s53
      %p55 = scmp.eq.s32.totalorder %s29, 0
      %p56 = por %p54, %p55
      %s58 = sadd.s32 %s57, 1
      %p61 = scmp.eq.s32.totalorder %s23, 1
      %p62 = scmp.ne.s32.totalorder %s57, %s59
      %p63 = scmp.eq.s32.totalorder %s23, 0
      %p64 = por %p62, %p63
      %p65 = scmp.ne.s32.totalorder %s57, %s59
      %p66 = scmp.eq.s32.totalorder %s28, 1
      %p67 = por %p65, %p66
      %p68 = scmp.ne.s32.totalorder %s59, %s60
      %p69 = scmp.eq.s32.totalorder %s28, 0
      %p70 = por %p68, %p69
      %p71 = scmp.ne.s32.totalorder %s59, %s60
      %p72 = scmp.eq.s32.totalorder %s29, 1
      %p73 = por %p71, %p72
      %p75 = scmp.ne.s32.totalorder %s60, %s74
      %p76 = scmp.eq.s32.totalorder %s29, 0
      %p77 = por %p75, %p76
      %s79 = sadd.s32 %s78, 1
      %p82 = scmp.eq.s32.totalorder %s23, 1
      %p83 = scmp.ne.s32.totalorder %s78, %s80
      %p84 = scmp.eq.s32.totalorder %s23, 0
      %p85 = por %p83, %p84
      %p86 = scmp.ne.s32.totalorder %s78, %s80
      %p87 = scmp.eq.s32.totalorder %s28, 1
      %p88 = por %p86, %p87
      %p89 = scmp.ne.s32.totalorder %s80, %s81
      %p90 = scmp.eq.s32.totalorder %s28, 0
      %p91 = por %p89, %p90
      %p92 = scmp.ne.s32.totalorder %s80, %s81
      %p93 = scmp.eq.s32.totalorder %s29, 1
      %p94 = por %p92, %p93
      %p96 = scmp.ne.s32.totalorder %s81, %s95
      %p97 = scmp.eq.s32.totalorder %s29, 0
      %p98 = por %p96, %p97
      %s100 = sadd.s32 %s99, 1
      %p103 = scmp.eq.s32.totalorder %s23, 1
      %p104 = scmp.ne.s32.totalorder %s99, %s101
      %p105 = scmp.eq.s32.totalorder %s23, 0
      %p106 = por %p104, %p105
      %p107 = scmp.ne.s32.totalorder %s99, %s101
      %p108 = scmp.eq.s32.totalorder %s28, 1
      %p109 = por %p107, %p108
      %p110 = scmp.ne.s32.totalorder %s101, %s102
      %p111 = scmp.eq.s32.totalorder %s28, 0
      %p112 = por %p110, %p111
      %p113 = scmp.ne.s32.totalorder %s101, %s102
      %p114 = scmp.eq.s32.totalorder %s29, 1
      %p115 = por %p113, %p114
      %p117 = scmp.ne.s32.totalorder %s102, %s116
      %p118 = scmp.eq.s32.totalorder %s29, 0
      %p119 = por %p117, %p118
      %s121 = sadd.s32 %s120, 1
      %p124 = scmp.eq.s32.totalorder %s23, 1
      %p125 = scmp.ne.s32.totalorder %s120, %s122
      %p126 = scmp.eq.s32.totalorder %s23, 0
      %p127 = por %p125, %p126
      %p128 = scmp.ne.s32.totalorder %s120, %s122
      %p129 = scmp.eq.s32.totalorder %s28, 1
      %p130 = por %p128, %p129
      %p131 = scmp.ne.s32.totalorder %s122, %s123
      %p132 = scmp.eq.s32.totalorder %s28, 0
      %p133 = por %p131, %p132
      %p134 = scmp.ne.s32.totalorder %s122, %s123
      %p135 = scmp.eq.s32.totalorder %s29, 1
      %p136 = por %p134, %p135
      %p138 = scmp.ne.s32.totalorder %s123, %s137
      %p139 = scmp.eq.s32.totalorder %s29, 0
      %p140 = por %p138, %p139
      %s142 = sadd.s32 %s141, 1
      %p145 = scmp.eq.s32.totalorder %s23, 1
      %p146 = scmp.ne.s32.totalorder %s141, %s143
      %p147 = scmp.eq.s32.totalorder %s23, 0
      %p148 = por %p146, %p147
      %p149 = scmp.ne.s32.totalorder %s141, %s143
      %p150 = scmp.eq.s32.totalorder %s28, 1
      %p151 = por %p149, %p150
      %p152 = scmp.ne.s32.totalorder %s143, %s144
      %p153 = scmp.eq.s32.totalorder %s28, 0
      %p154 = por %p152, %p153
      %p155 = scmp.ne.s32.totalorder %s143, %s144
      %p156 = scmp.eq.s32.totalorder %s29, 1
      %p157 = por %p155, %p156
      %p159 = scmp.ne.s32.totalorder %s144, %s158
      %p160 = scmp.eq.s32.totalorder %s29, 0
      %p161 = por %p159, %p160
      %s163 = sadd.s32 %s162, 1
      %p166 = scmp.eq.s32.totalorder %s23, 1
      %p167 = scmp.ne.s32.totalorder %s162, %s164
      %p168 = scmp.eq.s32.totalorder %s23, 0
      %p169 = por %p167, %p168
      %p170 = scmp.ne.s32.totalorder %s162, %s164
      %p171 = scmp.eq.s32.totalorder %s28, 1
      %p172 = por %p170, %p171
      %p173 = scmp.ne.s32.totalorder %s164, %s165
      %p174 = scmp.eq.s32.totalorder %s28, 0
      %p175 = por %p173, %p174
      %p176 = scmp.ne.s32.totalorder %s164, %s165
      %p177 = scmp.eq.s32.totalorder %s29, 1
      %p178 = por %p176, %p177
      %p180 = scmp.ne.s32.totalorder %s165, %s179
      %p181 = scmp.eq.s32.totalorder %s29, 0
      %p182 = por %p180, %p181
      %s184 = sadd.s32 %s183, 1
      %p187 = scmp.eq.s32.totalorder %s23, 1
      %p188 = scmp.ne.s32.totalorder %s183, %s185
      %p189 = scmp.eq.s32.totalorder %s23, 0
      %p190 = por %p188, %p189
      %p191 = scmp.ne.s32.totalorder %s183, %s185
      %p192 = scmp.eq.s32.totalorder %s28, 1
      %p193 = por %p191, %p192
      %p194 = scmp.ne.s32.totalorder %s185, %s186
      %p195 = scmp.eq.s32.totalorder %s28, 0
      %p196 = por %p194, %p195
      %p197 = scmp.ne.s32.totalorder %s185, %s186
      %p198 = scmp.eq.s32.totalorder %s29, 1
      %p199 = por %p197, %p198
      %p201 = scmp.ne.s32.totalorder %s186, %s200
      %p202 = scmp.eq.s32.totalorder %s29, 0
      %p203 = por %p201, %p202
      %s205 = sadd.s32 %s204, 1
      %p208 = scmp.eq.s32.totalorder %s23, 1
      %p209 = scmp.ne.s32.totalorder %s204, %s206
      %p210 = scmp.eq.s32.totalorder %s23, 0
      %p211 = por %p209, %p210
      %p212 = scmp.ne.s32.totalorder %s204, %s206
      %p213 = scmp.eq.s32.totalorder %s28, 1
      %p214 = por %p212, %p213
      %p215 = scmp.ne.s32.totalorder %s206, %s207
      %p216 = scmp.eq.s32.totalorder %s28, 0
      %p217 = por %p215, %p216
      %p218 = scmp.ne.s32.totalorder %s206, %s207
      %p219 = scmp.eq.s32.totalorder %s29, 1
      %p220 = por %p218, %p219
      %p222 = scmp.ne.s32.totalorder %s207, %s221
      %p223 = scmp.eq.s32.totalorder %s29, 0
      %p224 = por %p222, %p223
      %s225 = ssub.s32 %s23, %s30
      %p226 = scmp.eq.s32.totalorder %s225, 0
      %s228 = sadd.s32 %s227, 1
      %s229 = scalar_select %p226, %s227, %s228
      %p232 = pneg %p226
      %p233 = scmp.eq.s32.totalorder %s23, 1
      %p234 = por %p232, %p233
      %p235 = scmp.ne.s32.totalorder %s227, %s230
      %p236 = scmp.eq.s32.totalorder %s23, 0
      %p237 = por %p235, %p236
      %p238 = scmp.ne.s32.totalorder %s227, %s230
      %p239 = scmp.eq.s32.totalorder %s28, 1
      %p240 = por %p238, %p239
      %p241 = scmp.ne.s32.totalorder %s230, %s231
      %p242 = scmp.eq.s32.totalorder %s28, 0
      %p243 = por %p241, %p242
      %p244 = scmp.ne.s32.totalorder %s230, %s231
      %p245 = scmp.eq.s32.totalorder %s29, 1
      %p246 = por %p244, %p245
      %p248 = scmp.ne.s32.totalorder %s231, %s247
      %p249 = scmp.eq.s32.totalorder %s29, 0
      %p250 = por %p248, %p249
      %p251 = scmp.le.s32.totalorder 1, %s23
      %p252 = scmp.lt.s32.totalorder %s23, 3
      %p253 = pnand %p251, %p252
      %p254 = pneg %p253
      // Predicated region
      $region9: #{tpu_custom_call.1} parent=5 // pred_check
        _
      $region10: #{tpu_custom_call.1} parent=5 // pred_check_branch
        %256 = sbr.rel (%p253) target = $region12
      $region11: #{tpu_custom_call.1} parent=5 // pred_region
        %s257 = ssub.s32 %s23, 1
        // Predicated region
        $region13: #{tpu_custom_call.1} parent=11 // pred_check
          %p258 = pneg %p70
        $region14: #{tpu_custom_call.1} parent=11 // pred_check_branch
          %260 = sbr.rel (%p258) target = $region16
        $region15: #{tpu_custom_call.1} parent=11 // pred_region
          %262 = vsyncadd [#allocation6], 0
          %s263 = sshll.u32 %s1, 4
          %s264 = int_to_ptr.hbm [resolvable:$true] %s263
          %s265 = sshll.u32 [#allocation5], 4
          %s266 = int_to_ptr.vmem [resolvable:$true] %s265
          %271 = dma.hbm_to_vmem [thread:$0]  %s264, 256, %s266, [#allocation6], 64, 64, 4
        $region16: #{tpu_custom_call.1} parent=11 // pred_fallthru
          _
        // Predicated region
        $region17: #{tpu_custom_call.1} parent=11 // pred_check
          %p272 = pneg %p91
        $region18: #{tpu_custom_call.1} parent=11 // pred_check_branch
          %274 = sbr.rel (%p272) target = $region20
        $region19: #{tpu_custom_call.1} parent=11 // pred_region
          _
        $region20: #{tpu_custom_call.1} parent=11 // pred_fallthru
          _
        // Predicated region
        $region21: #{tpu_custom_call.1} parent=11 // pred_check
          %p275 = pneg %p112
        $region22: #{tpu_custom_call.1} parent=11 // pred_check_branch
          %277 = sbr.rel (%p275) target = $region24
        $region23: #{tpu_custom_call.1} parent=11 // pred_region
          %279 = vsyncadd [#allocation6], 0
          %s280 = sshll.u32 %s3, 4
          %s281 = int_to_ptr.hbm [resolvable:$true] %s280
          %s282 = sshll.u32 [#allocation7], 4
          %s283 = int_to_ptr.vmem [resolvable:$true] %s282
          %288 = dma.hbm_to_vmem [thread:$0]  %s281, 1024, %s283, [#allocation6], 64, 64, 4
        $region24: #{tpu_custom_call.1} parent=11 // pred_fallthru
          _
        // Predicated region
        $region25: #{tpu_custom_call.1} parent=11 // pred_check
          %p289 = pneg %p133
        $region26: #{tpu_custom_call.1} parent=11 // pred_check_branch
          %291 = sbr.rel (%p289) target = $region28
        $region27: #{tpu_custom_call.1} parent=11 // pred_region
          _
        $region28: #{tpu_custom_call.1} parent=11 // pred_fallthru
          _
        // Predicated region
        $region29: #{tpu_custom_call.1} parent=11 // pred_check
          %p292 = pneg %p154
        $region30: #{tpu_custom_call.1} parent=11 // pred_check_branch
          %294 = sbr.rel (%p292) target = $region32
        $region31: #{tpu_custom_call.1} parent=11 // pred_region
          %296 = vsyncadd [#allocation9], 0
          %s297 = sshll.u32 %s5, 4
          %s298 = int_to_ptr.hbm [resolvable:$true] %s297
          %s299 = sshll.u32 [#allocation8], 4
          %s300 = int_to_ptr.vmem [resolvable:$true] %s299
          %305 = dma.hbm_to_vmem [thread:$0]  %s298, 1024, %s300, [#allocation9], 64, 64, 4
        $region32: #{tpu_custom_call.1} parent=11 // pred_fallthru
          _
        // Predicated region
        $region33: #{tpu_custom_call.1} parent=11 // pred_check
          %p306 = pneg %p175
        $region34: #{tpu_custom_call.1} parent=11 // pred_check_branch
          %308 = sbr.rel (%p306) target = $region36
        $region35: #{tpu_custom_call.1} parent=11 // pred_region
          _
        $region36: #{tpu_custom_call.1} parent=11 // pred_fallthru
          _
        // Predicated region
        $region37: #{tpu_custom_call.1} parent=11 // pred_check
          %p309 = pneg %p196
        $region38: #{tpu_custom_call.1} parent=11 // pred_check_branch
          %311 = sbr.rel (%p309) target = $region40
        $region39: #{tpu_custom_call.1} parent=11 // pred_region
          %313 = vsyncadd [#allocation9], 0
          %s314 = sshll.u32 %s7, 4
          %s315 = int_to_ptr.hbm [resolvable:$true] %s314
          %s316 = sshll.u32 [#allocation10], 4
          %s317 = int_to_ptr.vmem [resolvable:$true] %s316
          %322 = dma.hbm_to_vmem [thread:$0]  %s315, 1024, %s317, [#allocation9], 64, 64, 4
        $region40: #{tpu_custom_call.1} parent=11 // pred_fallthru
          _
        // Predicated region
        $region41: #{tpu_custom_call.1} parent=11 // pred_check
          %p323 = pneg %p217
        $region42: #{tpu_custom_call.1} parent=11 // pred_check_branch
          %325 = sbr.rel (%p323) target = $region44
        $region43: #{tpu_custom_call.1} parent=11 // pred_region
          _
        $region44: #{tpu_custom_call.1} parent=11 // pred_fallthru
          _
      $region12: #{tpu_custom_call.1} parent=5 // pred_fallthru
        _
      %p326 = scmp.lt.s32.totalorder %s23, 2
      // Predicated region
      $region45: #{tpu_custom_call.1} parent=5 // pred_check
        %p327 = pneg %p326
      $region46: #{tpu_custom_call.1} parent=5 // pred_check_branch
        %329 = sbr.rel (%p327) target = $region48
      $region47: #{tpu_custom_call.1} parent=5 // pred_region
        // Predicated region
        $region49: #{tpu_custom_call.1} parent=47 // pred_check
          %p330 = pneg %p43
        $region50: #{tpu_custom_call.1} parent=47 // pred_check_branch
          %332 = sbr.rel (%p330) target = $region52
        $region51: #{tpu_custom_call.1} parent=47 // pred_region
          %s333 = sand.u32 %s33, 1
          %s334 = scalar_lea.sflag [#allocation3], %s333
          %s335 = sand.u32 %s33, 1
          %s336 = smul.addr %s335, 8
          %s337 = scalar_lea.vmem [#allocation2], %s336
          %339 = vsyncadd %s334, 0
          %s340 = smul.addr %s23, 8
          %s341 = scalar_lea.hbm %s0, %s340
          %s343 = sshll.u32 %s341, 4
          %s344 = int_to_ptr.hbm [resolvable:$true] %s343
          %s345 = sshll.u32 %s337, 4
          %s346 = int_to_ptr.vmem [resolvable:$true] %s345
          %348 = dma.hbm_to_vmem [thread:$0]  %s344, 128, %s346, %s334
        $region52: #{tpu_custom_call.1} parent=47 // pred_fallthru
          _
      $region48: #{tpu_custom_call.1} parent=5 // pred_fallthru
        _
      %p349 = scmp.le.s32.totalorder 1, %s23
      %p350 = scmp.lt.s32.totalorder %s23, 3
      %p351 = pnand %p349, %p350
      %p352 = pneg %p351
      // Predicated region
      $region53: #{tpu_custom_call.1} parent=5 // pred_check
        _
      $region54: #{tpu_custom_call.1} parent=5 // pred_check_branch
        %354 = sbr.rel (%p351) target = $region56
      $region55: #{tpu_custom_call.1} parent=5 // pred_region
        %s355 = ssub.s32 %s23, 1
        %s356 = sand.u32 %s36, 1
        %s357 = scalar_lea.sflag [#allocation3], %s356
        %s358 = sand.u32 %s36, 1
        %s359 = smul.addr %s358, 8
        %s360 = scalar_lea.vmem [#allocation2], %s359
        // Predicated region
        $region57: #{tpu_custom_call.1} parent=55 // pred_check
          %p361 = pneg %p49
        $region58: #{tpu_custom_call.1} parent=55 // pred_check_branch
          %363 = sbr.rel (%p361) target = $region60
        $region59: #{tpu_custom_call.1} parent=55 // pred_region
          %365 = dma.done %s357, 128
        $region60: #{tpu_custom_call.1} parent=55 // pred_fallthru
          _
        // Predicated region
        $region61: #{tpu_custom_call.1} parent=55 // pred_check
          %p366 = pneg %p70
        $region62: #{tpu_custom_call.1} parent=55 // pred_check_branch
          %368 = sbr.rel (%p366) target = $region64
        $region63: #{tpu_custom_call.1} parent=55 // pred_region
          %370 = dma.done [#allocation6], 256
        $region64: #{tpu_custom_call.1} parent=55 // pred_fallthru
          _
        // Predicated region
        $region65: #{tpu_custom_call.1} parent=55 // pred_check
          %p371 = pneg %p112
        $region66: #{tpu_custom_call.1} parent=55 // pred_check_branch
          %373 = sbr.rel (%p371) target = $region68
        $region67: #{tpu_custom_call.1} parent=55 // pred_region
          %375 = dma.done [#allocation6], 1024
        $region68: #{tpu_custom_call.1} parent=55 // pred_fallthru
          _
        // Predicated region
        $region69: #{tpu_custom_call.1} parent=55 // pred_check
          %p376 = pneg %p154
        $region70: #{tpu_custom_call.1} parent=55 // pred_check_branch
          %378 = sbr.rel (%p376) target = $region72
        $region71: #{tpu_custom_call.1} parent=55 // pred_region
          %380 = dma.done [#allocation9], 1024
        $region72: #{tpu_custom_call.1} parent=55 // pred_fallthru
          _
        // Predicated region
        $region73: #{tpu_custom_call.1} parent=55 // pred_check
          %p381 = pneg %p196
        $region74: #{tpu_custom_call.1} parent=55 // pred_check_branch
          %383 = sbr.rel (%p381) target = $region76
        $region75: #{tpu_custom_call.1} parent=55 // pred_region
          %385 = dma.done [#allocation9], 1024
        $region76: #{tpu_custom_call.1} parent=55 // pred_fallthru
          _
        %s386 = sand.u32 %s36, 1
        %s387 = scalar_lea.sflag [#allocation3], %s386
        %s388 = sand.u32 %s36, 1
        %s389 = smul.addr %s388, 8
        %s390 = scalar_lea.vmem [#allocation2], %s389
        %p391 = pneg %p49
        %p392 = pneg %p46
        %p393 = pneg %p70
        %p394 = pneg %p67
        %p395 = pneg %p91
        %p396 = pneg %p88
        %p397 = pneg %p112
        %p398 = pneg %p109
        %p399 = pneg %p133
        %p400 = pneg %p130
        %p401 = pneg %p154
        %p402 = pneg %p151
        %p403 = pneg %p175
        %p404 = pneg %p172
        %p405 = pneg %p196
        %p406 = pneg %p193
        %p407 = pneg %p217
        %p408 = pneg %p214
        %p409 = pneg %p243
        %p410 = pneg %p240
        %s411 = sand.u32 %s230, 1
        %s412 = scalar_lea.sflag [#allocation4], %s411
        %s413 = sand.u32 %s230, 1
        %s414 = smul.addr %s413, 8
        %s415 = scalar_lea.vmem [#allocation11], %s414
        %v417 = vld [vmem:[%s360] sm:$0xff]
        %v418 = vpack.c.bf16 %v417, %v417
        %v419 = vld [vmem:[#allocation5] sm:$0xf]
        %v420 = vld [vmem:[#allocation5 + $0x4] sm:$0xf]
        %v421 = vld [vmem:[#allocation5 + $0x8] sm:$0xf]
        %v422 = vld [vmem:[#allocation5 + $0xc] sm:$0xf]
        %v423 = vld [vmem:[%s2] sm:$0x1]
        %v425 = vperm.slane %v423, 0
        %v431 = vunpack.c.l.b16 %v419
        %v432 = vunpack.c.l.b16 %v420
        %v433 = vunpack.c.l.b16 %v421
        %v434 = vunpack.c.l.b16 %v422
        %v435 = vpack.c.b16 %v432, %v431
        %v436 = vpack.c.b16 %v434, %v433
        %vm439 = vcmask 261120
        %v441 = vsel %vm439, %v418, 0
        %443 = vmatpush.bf16.msra.mxu0 0
        %444 = vmatpush.bf16.msra.mxu0 0
        %445 = vmatpush.bf16.msra.mxu0 0
        %446 = vmatpush.bf16.msra.mxu0 0
        %447 = vmatpush.bf16.msra.mxu0 0
        %448 = vmatpush.bf16.msra.mxu0 0
        %449 = vmatpush.bf16.msra.mxu0 %v436
        %450 = vmatpush.bf16.msra.mxu0 %v435
        %451 = vmatmul.bf16.gmra.mxu0 %v441
        %v452 = vpop.f32.mrf.mxu0
        %v453 = vadd.f32 %v425, %v452
        %v454 = vpop.f32.mrf.mxu0
        %455 = vdwg.mxu0
        %v456 = vmax.f32 %v453, 0.0
        %v457 = vpack.c.bf16 %v456, %v456
        %v458 = vld [vmem:[#allocation7] sm:$0xf]
        %v459 = vld [vmem:[#allocation7 + $0x4] sm:$0xf]
        %v460 = vld [vmem:[#allocation7 + $0x8] sm:$0xf]
        %v461 = vld [vmem:[#allocation7 + $0xc] sm:$0xf]
        %v462 = vld [vmem:[#allocation7 + $0x10] sm:$0xf]
        %v463 = vld [vmem:[#allocation7 + $0x14] sm:$0xf]
        %v464 = vld [vmem:[#allocation7 + $0x18] sm:$0xf]
        %v465 = vld [vmem:[#allocation7 + $0x1c] sm:$0xf]
        %v466 = vld [vmem:[#allocation7 + $0x20] sm:$0xf]
        %v467 = vld [vmem:[#allocation7 + $0x24] sm:$0xf]
        %v468 = vld [vmem:[#allocation7 + $0x28] sm:$0xf]
        %v469 = vld [vmem:[#allocation7 + $0x2c] sm:$0xf]
        %v470 = vld [vmem:[#allocation7 + $0x30] sm:$0xf]
        %v471 = vld [vmem:[#allocation7 + $0x34] sm:$0xf]
        %v472 = vld [vmem:[#allocation7 + $0x38] sm:$0xf]
        %v473 = vld [vmem:[#allocation7 + $0x3c] sm:$0xf]
        %v474 = vld [vmem:[%s4] sm:$0x1]
        %v476 = vperm.slane %v474, 0
        %v494 = vunpack.c.l.b16 %v458
        %v495 = vunpack.c.l.b16 %v459
        %v496 = vunpack.c.l.b16 %v460
        %v497 = vunpack.c.l.b16 %v461
        %v498 = vunpack.c.l.b16 %v462
        %v499 = vunpack.c.l.b16 %v463
        %v500 = vunpack.c.l.b16 %v464
        %v501 = vunpack.c.l.b16 %v465
        %v502 = vunpack.c.l.b16 %v466
        %v503 = vunpack.c.l.b16 %v467
        %v504 = vunpack.c.l.b16 %v468
        %v505 = vunpack.c.l.b16 %v469
        %v506 = vunpack.c.l.b16 %v470
        %v507 = vunpack.c.l.b16 %v471
        %v508 = vunpack.c.l.b16 %v472
        %v509 = vunpack.c.l.b16 %v473
        %v510 = vpack.c.b16 %v495, %v494
        %v511 = vpack.c.b16 %v497, %v496
        %v512 = vpack.c.b16 %v499, %v498
        %v513 = vpack.c.b16 %v501, %v500
        %v514 = vpack.c.b16 %v503, %v502
        %v515 = vpack.c.b16 %v505, %v504
        %v516 = vpack.c.b16 %v507, %v506
        %v517 = vpack.c.b16 %v509, %v508
        %526 = vmatpush.bf16.msra.mxu0 %v517
        %527 = vmatpush.bf16.msra.mxu0 %v516
        %528 = vmatpush.bf16.msra.mxu0 %v515
        %529 = vmatpush.bf16.msra.mxu0 %v514
        %530 = vmatpush.bf16.msra.mxu0 %v513
        %531 = vmatpush.bf16.msra.mxu0 %v512
        %532 = vmatpush.bf16.msra.mxu0 %v511
        %533 = vmatpush.bf16.msra.mxu0 %v510
        %534 = vmatmul.bf16.gmra.mxu0 %v457
        %v535 = vpop.f32.mrf.mxu0
        %v536 = vadd.f32 %v476, %v535
        %v537 = vpop.f32.mrf.mxu0
        %538 = vdwg.mxu0
        %v539 = vmax.f32 %v536, 0.0
        %v540 = vpack.c.bf16 %v539, %v539
        %v541 = vld [vmem:[#allocation8] sm:$0xf]
        %v542 = vld [vmem:[#allocation8 + $0x4] sm:$0xf]
        %v543 = vld [vmem:[#allocation8 + $0x8] sm:$0xf]
        %v544 = vld [vmem:[#allocation8 + $0xc] sm:$0xf]
        %v545 = vld [vmem:[#allocation8 + $0x10] sm:$0xf]
        %v546 = vld [vmem:[#allocation8 + $0x14] sm:$0xf]
        %v547 = vld [vmem:[#allocation8 + $0x18] sm:$0xf]
        %v548 = vld [vmem:[#allocation8 + $0x1c] sm:$0xf]
        %v549 = vld [vmem:[#allocation8 + $0x20] sm:$0xf]
        %v550 = vld [vmem:[#allocation8 + $0x24] sm:$0xf]
        %v551 = vld [vmem:[#allocation8 + $0x28] sm:$0xf]
        %v552 = vld [vmem:[#allocation8 + $0x2c] sm:$0xf]
        %v553 = vld [vmem:[#allocation8 + $0x30] sm:$0xf]
        %v554 = vld [vmem:[#allocation8 + $0x34] sm:$0xf]
        %v555 = vld [vmem:[#allocation8 + $0x38] sm:$0xf]
        %v556 = vld [vmem:[#allocation8 + $0x3c] sm:$0xf]
        %v557 = vld [vmem:[%s6] sm:$0x1]
        %v559 = vperm.slane %v557, 0
        %v577 = vunpack.c.l.b16 %v541
        %v578 = vunpack.c.l.b16 %v542
        %v579 = vunpack.c.l.b16 %v543
        %v580 = vunpack.c.l.b16 %v544
        %v581 = vunpack.c.l.b16 %v545
        %v582 = vunpack.c.l.b16 %v546
        %v583 = vunpack.c.l.b16 %v547
        %v584 = vunpack.c.l.b16 %v548
        %v585 = vunpack.c.l.b16 %v549
        %v586 = vunpack.c.l.b16 %v550
        %v587 = vunpack.c.l.b16 %v551
        %v588 = vunpack.c.l.b16 %v552
        %v589 = vunpack.c.l.b16 %v553
        %v590 = vunpack.c.l.b16 %v554
        %v591 = vunpack.c.l.b16 %v555
        %v592 = vunpack.c.l.b16 %v556
        %v593 = vpack.c.b16 %v578, %v577
        %v594 = vpack.c.b16 %v580, %v579
        %v595 = vpack.c.b16 %v582, %v581
        %v596 = vpack.c.b16 %v584, %v583
        %v597 = vpack.c.b16 %v586, %v585
        %v598 = vpack.c.b16 %v588, %v587
        %v599 = vpack.c.b16 %v590, %v589
        %v600 = vpack.c.b16 %v592, %v591
        %609 = vmatpush.bf16.msra.mxu0 %v600
        %610 = vmatpush.bf16.msra.mxu0 %v599
        %611 = vmatpush.bf16.msra.mxu0 %v598
        %612 = vmatpush.bf16.msra.mxu0 %v597
        %613 = vmatpush.bf16.msra.mxu0 %v596
        %614 = vmatpush.bf16.msra.mxu0 %v595
        %615 = vmatpush.bf16.msra.mxu0 %v594
        %616 = vmatpush.bf16.msra.mxu0 %v593
        %617 = vmatmul.bf16.gmra.mxu0 %v540
        %v618 = vpop.f32.mrf.mxu0
        %v619 = vadd.f32 %v559, %v618
        %v620 = vpop.f32.mrf.mxu0
        %621 = vdwg.mxu0
        %v622 = vmax.f32 %v619, 0.0
        %v623 = vpack.c.bf16 %v622, %v622
        %v624 = vld [vmem:[#allocation10] sm:$0xf]
        %v625 = vld [vmem:[#allocation10 + $0x4] sm:$0xf]
        %v626 = vld [vmem:[#allocation10 + $0x8] sm:$0xf]
        %v627 = vld [vmem:[#allocation10 + $0xc] sm:$0xf]
        %v628 = vld [vmem:[#allocation10 + $0x10] sm:$0xf]
        %v629 = vld [vmem:[#allocation10 + $0x14] sm:$0xf]
        %v630 = vld [vmem:[#allocation10 + $0x18] sm:$0xf]
        %v631 = vld [vmem:[#allocation10 + $0x1c] sm:$0xf]
        %v632 = vld [vmem:[#allocation10 + $0x20] sm:$0xf]
        %v633 = vld [vmem:[#allocation10 + $0x24] sm:$0xf]
        %v634 = vld [vmem:[#allocation10 + $0x28] sm:$0xf]
        %v635 = vld [vmem:[#allocation10 + $0x2c] sm:$0xf]
        %v636 = vld [vmem:[#allocation10 + $0x30] sm:$0xf]
        %v637 = vld [vmem:[#allocation10 + $0x34] sm:$0xf]
        %v638 = vld [vmem:[#allocation10 + $0x38] sm:$0xf]
        %v639 = vld [vmem:[#allocation10 + $0x3c] sm:$0xf]
        %v640 = vld [vmem:[%s8] sm:$0x1]
        %v642 = vperm.slane %v640, 0
        %v660 = vunpack.c.l.b16 %v624
        %v661 = vunpack.c.l.b16 %v625
        %v662 = vunpack.c.l.b16 %v626
        %v663 = vunpack.c.l.b16 %v627
        %v664 = vunpack.c.l.b16 %v628
        %v665 = vunpack.c.l.b16 %v629
        %v666 = vunpack.c.l.b16 %v630
        %v667 = vunpack.c.l.b16 %v631
        %v668 = vunpack.c.l.b16 %v632
        %v669 = vunpack.c.l.b16 %v633
        %v670 = vunpack.c.l.b16 %v634
        %v671 = vunpack.c.l.b16 %v635
        %v672 = vunpack.c.l.b16 %v636
        %v673 = vunpack.c.l.b16 %v637
        %v674 = vunpack.c.l.b16 %v638
        %v675 = vunpack.c.l.b16 %v639
        %v676 = vpack.c.b16 %v661, %v660
        %v677 = vpack.c.b16 %v663, %v662
        %v678 = vpack.c.b16 %v665, %v664
        %v679 = vpack.c.b16 %v667, %v666
        %v680 = vpack.c.b16 %v669, %v668
        %v681 = vpack.c.b16 %v671, %v670
        %v682 = vpack.c.b16 %v673, %v672
        %v683 = vpack.c.b16 %v675, %v674
        %692 = vmatpush.bf16.msra.mxu0 %v683
        %693 = vmatpush.bf16.msra.mxu0 %v682
        %694 = vmatpush.bf16.msra.mxu0 %v681
        %695 = vmatpush.bf16.msra.mxu0 %v680
        %696 = vmatpush.bf16.msra.mxu0 %v679
        %697 = vmatpush.bf16.msra.mxu0 %v678
        %698 = vmatpush.bf16.msra.mxu0 %v677
        %699 = vmatpush.bf16.msra.mxu0 %v676
        %700 = vmatmul.bf16.gmra.mxu0 %v623
        %v701 = vpop.f32.mrf.mxu0
        %v702 = vadd.f32 %v642, %v701
        %v703 = vpop.f32.mrf.mxu0
        %704 = vdwg.mxu0
        %705 = vst [vmem:[%s415] sm:$0xff] %v702
        %s706 = sand.u32 %s230, 1
        %s707 = scalar_lea.sflag [#allocation4], %s706
        %s708 = sand.u32 %s230, 1
        %s709 = smul.addr %s708, 8
        %s710 = scalar_lea.vmem [#allocation11], %s709
        // Predicated region
        $region77: #{tpu_custom_call.1} parent=55 // pred_check
          %p711 = pneg %p240
        $region78: #{tpu_custom_call.1} parent=55 // pred_check_branch
          %713 = sbr.rel (%p711) target = $region80
        $region79: #{tpu_custom_call.1} parent=55 // pred_region
          %715 = vsyncadd %s707, 0
          %s716 = smul.addr %s28, 8
          %s717 = scalar_lea.hbm %s9, %s716
          %s719 = sshll.u32 %s710, 4
          %s720 = int_to_ptr.vmem [resolvable:$true] %s719
          %s721 = sshll.u32 %s717, 4
          %s722 = int_to_ptr.hbm [resolvable:$true] %s721
          %724 = dma.vmem_to_hbm [thread:$0]  %s720, 128, %s722, %s707
        $region80: #{tpu_custom_call.1} parent=55 // pred_fallthru
          _
      $region56: #{tpu_custom_call.1} parent=5 // pred_fallthru
        _
      %p725 = scmp.le.s32.totalorder 2, %s23
      // Predicated region
      $region81: #{tpu_custom_call.1} parent=5 // pred_check
        %p726 = pneg %p725
      $region82: #{tpu_custom_call.1} parent=5 // pred_check_branch
        %728 = sbr.rel (%p726) target = $region84
      $region83: #{tpu_custom_call.1} parent=5 // pred_region
        %s729 = ssub.s32 %s23, 2
        // Predicated region
        $region85: #{tpu_custom_call.1} parent=83 // pred_check
          %p730 = pneg %p246
        $region86: #{tpu_custom_call.1} parent=83 // pred_check_branch
          %732 = sbr.rel (%p730) target = $region88
        $region87: #{tpu_custom_call.1} parent=83 // pred_region
          %s733 = sand.u32 %s231, 1
          %s734 = scalar_lea.sflag [#allocation4], %s733
          %s735 = sand.u32 %s231, 1
          %s736 = smul.addr %s735, 8
          %s737 = scalar_lea.vmem [#allocation11], %s736
          %739 = dma.done %s734, 128
        $region88: #{tpu_custom_call.1} parent=83 // pred_fallthru
          _
      $region84: #{tpu_custom_call.1} parent=5 // pred_fallthru
        _
    $region6: #{tpu_custom_call.1} parent=1 // loop_footer
      %s27 = sadd.s32 1, %s23
    $region7: #{tpu_custom_call.1} parent=1 // loop_footer_branch
      %22 = sbr.rel target = $region3
    $region8: #{tpu_custom_call.1} parent=1 // loop_exit
      _
    %740 = vsyncpa [#allocation3], 1
    %s741 = scalar_lea.sflag [#allocation3], 1
    %742 = vsyncpa %s741, 1
    %743 = vsyncpa [#allocation6], 1
    %744 = vsyncpa [#allocation9], 1
    %745 = vsyncpa [#allocation4], 1
    %s746 = scalar_lea.sflag [#allocation4], 1
    %747 = vsyncpa %s746, 1

</llo_original>
